<compile_context>
chip_gen: v5e
topology: v5e:2x2
jax: 0.10.0
libtpu: 0.0.40
codegen_flags: <defaults>
</compile_context>

<pallas_src>
import jax
import jax.numpy as jnp
from jax.experimental import pallas as pl
from jax.experimental.pallas import tpu as pltpu

IN_F = 28
HID_F = 30
OUT_F = 35


def _round_up(n, m):
    return ((n + m - 1) // m) * m


def _choose_tiling(batch, block_b):
    """Pick (tile_b, padded_b, n_tiles): >=2 tiles for B>8, padding <= few rows."""
    if batch <= 8:
        return 8, 8, 1
    n_tiles = max(pl.cdiv(batch, block_b), 2)   # >=2 steps: v7x dual-TC + pipelining
    tb = _round_up(pl.cdiv(batch, n_tiles), 8)  # sublane-aligned tile
    padded_b = n_tiles * tb                     # padding <= 8*n_tiles - 1 rows
    return tb, padded_b, n_tiles


def _decoder_kernel(x_ref, w1_ref, b1_ref, w2_ref, b2_ref, out_ref):
    # x_ref:  [TB, 28]  w1_ref: [28, 30]  b1_ref: [1, 30]
    # w2_ref: [30, 35]  b2_ref: [1, 35]   out_ref: [TB, 35]
    x = x_ref[...]

    # hidden_layer_1 + Tanh (MXU matmul, f32 accumulate)
    h = jnp.dot(x, w1_ref[...], preferred_element_type=jnp.float32)
    h = jnp.tanh(h + b1_ref[...])

    # Dropout(p=0.2) in eval mode == identity (no-op here).

    # hidden_layer_2
    y = jnp.dot(h.astype(w2_ref.dtype), w2_ref[...],
                preferred_element_type=jnp.float32)
    y = y + b2_ref[...]

    out_ref[...] = y.astype(out_ref.dtype)


def esg_gen_decoder_35(x, w1, b1, w2, b2, *, block_b=8192, use_pallas=None,
                       use_bf16=False):
    """Forward pass. Returns dict matching the PyTorch module's output."""
    B = x.shape[0]

    if use_pallas is None:
        # Below a few thousand rows the grid is 1-2 tiny steps; launch +
        # per-step overhead dominates and plain XLA is as fast or faster.
        use_pallas = B > 2048

    if not use_pallas:
        h = jnp.tanh(
            jnp.dot(x, w1, preferred_element_type=jnp.float32) + b1)
        out = jnp.dot(h.astype(w2.dtype), w2,
                      preferred_element_type=jnp.float32) + b2
        return {"x_input": x, "x_output": out}

    # Cap the tile so the double-buffered x+out working set stays well under
    # v5e's 16 MiB default scoped VMEM (16384 rows -> ~8.2 MiB).
    block_b = min(block_b, 16384)
    tb, padded_b, _ = _choose_tiling(B, block_b)

    x_in = x
    if use_bf16:
        # Halves input HBM traffic; accumulation stays f32, output stays f32.
        x_in = x_in.astype(jnp.bfloat16)
        w1 = w1.astype(jnp.bfloat16)
        w2 = w2.astype(jnp.bfloat16)

    if padded_b != B:
        x_in = jnp.pad(x_in, ((0, padded_b - B), (0, 0)))

    out = pl.pallas_call(
        _decoder_kernel,
        out_shape=jax.ShapeDtypeStruct((padded_b, OUT_F), jnp.float32),
        grid=(padded_b // tb,),
        in_specs=[
            pl.BlockSpec((tb, IN_F), lambda i: (i, 0)),        # x: tiled over batch
            pl.BlockSpec((IN_F, HID_F), lambda i: (0, 0)),     # w1: resident
            pl.BlockSpec((1, HID_F), lambda i: (0, 0)),        # b1: resident
            pl.BlockSpec((HID_F, OUT_F), lambda i: (0, 0)),    # w2: resident
            pl.BlockSpec((1, OUT_F), lambda i: (0, 0)),        # b2: resident
        ],
        out_specs=pl.BlockSpec((tb, OUT_F), lambda i: (i, 0)),
        compiler_params=pltpu.CompilerParams(
            dimension_semantics=("parallel",)
        ),
    )(x_in, w1, b1, w2, b2)

    if padded_b != B:
        out = out[:B]
    return {"x_input": x, "x_output": out}


def _init_params(key):
    # Deterministic init mimicking PyTorch Linear default
    # (uniform(-1/sqrt(in), 1/sqrt(in))).
    k1, k2, k3, k4 = jax.random.split(key, 4)
    lim1 = 1.0 / jnp.sqrt(jnp.float32(IN_F))
    lim2 = 1.0 / jnp.sqrt(jnp.float32(HID_F))
    w1 = jax.random.uniform(k1, (IN_F, HID_F), jnp.float32, -lim1, lim1)
    b1 = jax.random.uniform(k2, (1, HID_F), jnp.float32, -lim1, lim1)
    w2 = jax.random.uniform(k3, (HID_F, OUT_F), jnp.float32, -lim2, lim2)
    b2 = jax.random.uniform(k4, (1, OUT_F), jnp.float32, -lim2, lim2)
    return w1, b1, w2, b2


if __name__ == "__main__":
    key = jax.random.PRNGKey(0)
    k_params, k_x = jax.random.split(key)

    w1, b1, w2, b2 = _init_params(k_params)

    # Small batch, deliberately NOT a multiple of 8, to exercise the padding
    # path AND the >=2-tile grid (grid=(2,), tb=8 here); force the Pallas
    # path so the kernel actually runs.
    batch = 13
    x = jax.random.normal(k_x, (batch, IN_F), jnp.float32)

    result = esg_gen_decoder_35(x, w1, b1, w2, b2, use_pallas=True)
    jax.block_until_ready(result["x_output"])

    # Pure-JAX reference check
    ref = jnp.tanh(x @ w1 + b1) @ w2 + b2
    assert result["x_output"].shape == (batch, OUT_F)
    assert jnp.allclose(result["x_output"], ref, atol=1e-5, rtol=1e-5)

    print("KERNEL_OK")
</pallas_src>

<mosaic_0001>
module attributes {stable_mosaic.version = 11 : i64} {
  func.func @_decoder_kernel(%arg0: i32, %arg1: memref<8x28xf32, #tpu.memory_space<vmem>>, %arg2: memref<28x30xf32, #tpu.memory_space<vmem>>, %arg3: memref<1x30xf32, #tpu.memory_space<vmem>>, %arg4: memref<30x35xf32, #tpu.memory_space<vmem>>, %arg5: memref<1x35xf32, #tpu.memory_space<vmem>>, %arg6: memref<8x35xf32, #tpu.memory_space<vmem>>) attributes {dimension_semantics = [#tpu.dimension_semantics<parallel>], iteration_bounds = array<i64: 2>, scalar_prefetch = 0 : i64, scratch_operands = 0 : i64, tpu.core_type = #tpu.core_type<tc>, window_params = [{transform_indices = @transform_0, window_bounds = array<i64: 8, 28>}, {pipeline_mode = #tpu.pipeline_mode<synchronous>, transform_indices = @transform_1, window_bounds = array<i64: 28, 30>}, {pipeline_mode = #tpu.pipeline_mode<synchronous>, transform_indices = @transform_2, window_bounds = array<i64: 1, 30>}, {pipeline_mode = #tpu.pipeline_mode<synchronous>, transform_indices = @transform_3, window_bounds = array<i64: 30, 35>}, {pipeline_mode = #tpu.pipeline_mode<synchronous>, transform_indices = @transform_4, window_bounds = array<i64: 1, 35>}, {transform_indices = @transform_5, window_bounds = array<i64: 8, 35>}]} {
    %c0 = arith.constant 0 : index
    %c0_0 = arith.constant 0 : index
    %0 = vector.load %arg1[%c0, %c0_0] : memref<8x28xf32, #tpu.memory_space<vmem>>, vector<8x28xf32>
    %c0_1 = arith.constant 0 : index
    %c0_2 = arith.constant 0 : index
    %1 = vector.load %arg2[%c0_1, %c0_2] : memref<28x30xf32, #tpu.memory_space<vmem>>, vector<28x30xf32>
    %cst = arith.constant dense<0.000000e+00> : vector<8x30xf32>
    %2 = tpu.matmul %0, %1, %cst {dimension_numbers = #tpu.dot_dimension_numbers<[1], [0], [0], [1], [0, 0, 1, 1], [], []>} : vector<8x28xf32>, vector<28x30xf32>, vector<8x30xf32> -> vector<8x30xf32>
    %c0_3 = arith.constant 0 : index
    %c0_4 = arith.constant 0 : index
    %3 = vector.load %arg3[%c0_3, %c0_4] : memref<1x30xf32, #tpu.memory_space<vmem>>, vector<1x30xf32>
    %4 = vector.broadcast %3 : vector<1x30xf32> to vector<8x30xf32>
    %5 = arith.addf %2, %4 : vector<8x30xf32>
    %6 = math.tanh %5 : vector<8x30xf32>
    %c0_5 = arith.constant 0 : index
    %c0_6 = arith.constant 0 : index
    %7 = vector.load %arg4[%c0_5, %c0_6] : memref<30x35xf32, #tpu.memory_space<vmem>>, vector<30x35xf32>
    %cst_7 = arith.constant dense<0.000000e+00> : vector<8x35xf32>
    %8 = tpu.matmul %6, %7, %cst_7 {dimension_numbers = #tpu.dot_dimension_numbers<[1], [0], [0], [1], [0, 0, 1, 1], [], []>} : vector<8x30xf32>, vector<30x35xf32>, vector<8x35xf32> -> vector<8x35xf32>
    %c0_8 = arith.constant 0 : index
    %c0_9 = arith.constant 0 : index
    %9 = vector.load %arg5[%c0_8, %c0_9] : memref<1x35xf32, #tpu.memory_space<vmem>>, vector<1x35xf32>
    %10 = vector.broadcast %9 : vector<1x35xf32> to vector<8x35xf32>
    %11 = arith.addf %8, %10 : vector<8x35xf32>
    %c0_10 = arith.constant 0 : index
    %c0_11 = arith.constant 0 : index
    %12 = vector.load %arg6[%c0_10, %c0_11] : memref<8x35xf32, #tpu.memory_space<vmem>>, vector<8x35xf32>
    tpu.vector_store %arg6[%c0_10, %c0_11], %11 {strides = array<i32>} : memref<8x35xf32, #tpu.memory_space<vmem>>, vector<8x35xf32>,
    return
  }
  func.func @transform_0(%arg0: i32) -> (i32, i32) {
    %c0_i32 = arith.constant 0 : i32
    %c0_i32_0 = arith.constant 0 : i32
    return %arg0, %c0_i32 : i32, i32
  }
  func.func @transform_1(%arg0: i32) -> (i32, i32) {
    %c0_i32 = arith.constant 0 : i32
    %c0_i32_0 = arith.constant 0 : i32
    %c0_i32_1 = arith.constant 0 : i32
    return %c0_i32, %c0_i32_0 : i32, i32
  }
  func.func @transform_2(%arg0: i32) -> (i32, i32) {
    %c0_i32 = arith.constant 0 : i32
    %c0_i32_0 = arith.constant 0 : i32
    %c0_i32_1 = arith.constant 0 : i32
    return %c0_i32, %c0_i32_0 : i32, i32
  }
  func.func @transform_3(%arg0: i32) -> (i32, i32) {
    %c0_i32 = arith.constant 0 : i32
    %c0_i32_0 = arith.constant 0 : i32
    %c0_i32_1 = arith.constant 0 : i32
    return %c0_i32, %c0_i32_0 : i32, i32
  }
  func.func @transform_4(%arg0: i32) -> (i32, i32) {
    %c0_i32 = arith.constant 0 : i32
    %c0_i32_0 = arith.constant 0 : i32
    %c0_i32_1 = arith.constant 0 : i32
    return %c0_i32, %c0_i32_0 : i32, i32
  }
  func.func @transform_5(%arg0: i32) -> (i32, i32) {
    %c0_i32 = arith.constant 0 : i32
    %c0_i32_0 = arith.constant 0 : i32
    return %arg0, %c0_i32 : i32, i32
  }
}

</mosaic_0001>

<llo_original>
// kernel: tpu_custom_call.1
$region0: #{tpu_custom_call.1}
  #allocation0 [shape = 'u32[]', space=smem, size = 0x4, offset = 0x4, fixed_abs, tag = 'smem constant byte address 0x4 - core index']
  #allocation1 [shape = 'u32[72,128]{1,0:T(1,128)}', space=vmem, size = 0x9000, scoped, tag = 'internal scratch']
  %s0 = inlined_call_operand.hbm [shape: f32[16,28], index: 0, kind: input, shape index: {}]
  %s1 = inlined_call_operand.hbm [shape: f32[28,30], index: 1, kind: input, shape index: {}]
  %s2 = inlined_call_operand.vmem [shape: f32[1,30], index: 2, kind: input, shape index: {}]
  %s3 = inlined_call_operand.hbm [shape: f32[30,35], index: 3, kind: input, shape index: {}]
  %s4 = inlined_call_operand.vmem [shape: f32[1,35], index: 4, kind: input, shape index: {}]
  %s5 = inlined_call_operand.hbm [shape: f32[16,35], index: 5, kind: output, shape index: {}]
  %s6 = sld [smem:[#allocation0]]
  $region65: #{tpu_custom_call.1} parent=0
    _
  %s8 = ssub.s32 1, %s6
  %s9 = scalar_select 0, %s8, %s6
  $region1: #{tpu_custom_call.1} parent=0
    #allocation2 [shape = 'u8[8192]{0}', space=vmem, size = 0x2000, scoped, tag = 'input window, operand 0']
    #allocation3 [shape = 's32[2]{0}', space=sflag, size = 0x8, scoped, tag = 'scoped memory for tpu_custom_call.1']
    #allocation4 [shape = 's32[2]{0}', space=sflag, size = 0x8, scoped, tag = 'scoped memory for tpu_custom_call.1']
    #allocation5 [shape = 'u8[16384]{0}', space=vmem, size = 0x4000, scoped, tag = 'input window, operand 1, single buffered']
    #allocation6 [shape = 's32[1]{0}', space=sflag, size = 0x4, scoped, tag = 'scoped memory for tpu_custom_call.1']
    #allocation7 [shape = 'u8[16384]{0}', space=vmem, size = 0x4000, scoped, tag = 'input window, operand 3, single buffered']
    #allocation8 [shape = 'u8[8192]{0}', space=vmem, size = 0x2000, scoped, tag = 'output window, operand 0']
    %10 = vsyncpa [#allocation3], 0
    %s11 = scalar_lea.sflag [#allocation3], 1
    %12 = vsyncpa %s11, 0
    %13 = vsyncpa [#allocation6], 0
    %14 = vsyncpa [#allocation4], 0
    %s15 = scalar_lea.sflag [#allocation4], 1
    %16 = vsyncpa %s15, 0
    loop: start=0, step=1, limit=4
    $region2: #{tpu_custom_call.1} parent=1 // loop_pre_header
      _
    $region3: #{tpu_custom_call.1} parent=1 // loop_header
      %s18 = sphi 0, %s22
      %p19 = scmp.ge.s32.totalorder %s18, 4
      %s28 = sphi 0, %s30
      %s31 = sphi 0, %s28
      %s32 = sphi 0, %s31
      %s48 = sphi 0, %s32
      %s52 = sphi 0, %s52
      %s54 = sphi 0, %s52
      %s55 = sphi 0, %s54
      %s69 = sphi 0, %s55
      %s73 = sphi 0, %s73
      %s75 = sphi 0, %s73
      %s76 = sphi 0, %s75
      %s90 = sphi 0, %s76
      %s94 = sphi 0, %s94
      %s96 = sphi 0, %s94
      %s97 = sphi 0, %s96
      %s111 = sphi 0, %s97
      %s115 = sphi 0, %s115
      %s117 = sphi 0, %s115
      %s118 = sphi 0, %s117
      %s132 = sphi 0, %s118
      %s138 = sphi 0, %s140
      %s141 = sphi 0, %s138
      %s142 = sphi 0, %s141
      %s158 = sphi 0, %s142
    $region4: #{tpu_custom_call.1} parent=1 // loop_header_branch
      %21 = sbr.rel (%p19) target = $region8
    $region5: #{tpu_custom_call.1} parent=1 // loop_body
      %s23 = ssub.s32 %s18, 1
      %s24 = ssub.s32 %s18, 2
      %s25 = sadd.s32 %s18, 1
      %s26 = ssub.s32 %s18, %s25
      %p27 = scmp.eq.s32.totalorder %s26, 0
      %s29 = sadd.s32 %s28, 1
      %s30 = scalar_select %p27, %s28, %s29
      %p33 = pneg %p27
      %p34 = scmp.eq.s32.totalorder %s18, 1
      %p35 = por %p33, %p34
      %p36 = scmp.ne.s32.totalorder %s28, %s31
      %p37 = scmp.eq.s32.totalorder %s18, 0
      %p38 = por %p36, %p37
      %p39 = scmp.ne.s32.totalorder %s28, %s31
      %p40 = scmp.eq.s32.totalorder %s23, 1
      %p41 = por %p39, %p40
      %p42 = scmp.ne.s32.totalorder %s31, %s32
      %p43 = scmp.eq.s32.totalorder %s23, 0
      %p44 = por %p42, %p43
      %p45 = scmp.ne.s32.totalorder %s31, %s32
      %p46 = scmp.eq.s32.totalorder %s24, 1
      %p47 = por %p45, %p46
      %p49 = scmp.ne.s32.totalorder %s32, %s48
      %p50 = scmp.eq.s32.totalorder %s24, 0
      %p51 = por %p49, %p50
      %s53 = sadd.s32 %s52, 1
      %p56 = scmp.eq.s32.totalorder %s18, 1
      %p57 = scmp.ne.s32.totalorder %s52, %s54
      %p58 = scmp.eq.s32.totalorder %s18, 0
      %p59 = por %p57, %p58
      %p60 = scmp.ne.s32.totalorder %s52, %s54
      %p61 = scmp.eq.s32.totalorder %s23, 1
      %p62 = por %p60, %p61
      %p63 = scmp.ne.s32.totalorder %s54, %s55
      %p64 = scmp.eq.s32.totalorder %s23, 0
      %p65 = por %p63, %p64
      %p66 = scmp.ne.s32.totalorder %s54, %s55
      %p67 = scmp.eq.s32.totalorder %s24, 1
      %p68 = por %p66, %p67
      %p70 = scmp.ne.s32.totalorder %s55, %s69
      %p71 = scmp.eq.s32.totalorder %s24, 0
      %p72 = por %p70, %p71
      %s74 = sadd.s32 %s73, 1
      %p77 = scmp.eq.s32.totalorder %s18, 1
      %p78 = scmp.ne.s32.totalorder %s73, %s75
      %p79 = scmp.eq.s32.totalorder %s18, 0
      %p80 = por %p78, %p79
      %p81 = scmp.ne.s32.totalorder %s73, %s75
      %p82 = scmp.eq.s32.totalorder %s23, 1
      %p83 = por %p81, %p82
      %p84 = scmp.ne.s32.totalorder %s75, %s76
      %p85 = scmp.eq.s32.totalorder %s23, 0
      %p86 = por %p84, %p85
      %p87 = scmp.ne.s32.totalorder %s75, %s76
      %p88 = scmp.eq.s32.totalorder %s24, 1
      %p89 = por %p87, %p88
      %p91 = scmp.ne.s32.totalorder %s76, %s90
      %p92 = scmp.eq.s32.totalorder %s24, 0
      %p93 = por %p91, %p92
      %s95 = sadd.s32 %s94, 1
      %p98 = scmp.eq.s32.totalorder %s18, 1
      %p99 = scmp.ne.s32.totalorder %s94, %s96
      %p100 = scmp.eq.s32.totalorder %s18, 0
      %p101 = por %p99, %p100
      %p102 = scmp.ne.s32.totalorder %s94, %s96
      %p103 = scmp.eq.s32.totalorder %s23, 1
      %p104 = por %p102, %p103
      %p105 = scmp.ne.s32.totalorder %s96, %s97
      %p106 = scmp.eq.s32.totalorder %s23, 0
      %p107 = por %p105, %p106
      %p108 = scmp.ne.s32.totalorder %s96, %s97
      %p109 = scmp.eq.s32.totalorder %s24, 1
      %p110 = por %p108, %p109
      %p112 = scmp.ne.s32.totalorder %s97, %s111
      %p113 = scmp.eq.s32.totalorder %s24, 0
      %p114 = por %p112, %p113
      %s116 = sadd.s32 %s115, 1
      %p119 = scmp.eq.s32.totalorder %s18, 1
      %p120 = scmp.ne.s32.totalorder %s115, %s117
      %p121 = scmp.eq.s32.totalorder %s18, 0
      %p122 = por %p120, %p121
      %p123 = scmp.ne.s32.totalorder %s115, %s117
      %p124 = scmp.eq.s32.totalorder %s23, 1
      %p125 = por %p123, %p124
      %p126 = scmp.ne.s32.totalorder %s117, %s118
      %p127 = scmp.eq.s32.totalorder %s23, 0
      %p128 = por %p126, %p127
      %p129 = scmp.ne.s32.totalorder %s117, %s118
      %p130 = scmp.eq.s32.totalorder %s24, 1
      %p131 = por %p129, %p130
      %p133 = scmp.ne.s32.totalorder %s118, %s132
      %p134 = scmp.eq.s32.totalorder %s24, 0
      %p135 = por %p133, %p134
      %s136 = ssub.s32 %s18, %s25
      %p137 = scmp.eq.s32.totalorder %s136, 0
      %s139 = sadd.s32 %s138, 1
      %s140 = scalar_select %p137, %s138, %s139
      %p143 = pneg %p137
      %p144 = scmp.eq.s32.totalorder %s18, 1
      %p145 = por %p143, %p144
      %p146 = scmp.ne.s32.totalorder %s138, %s141
      %p147 = scmp.eq.s32.totalorder %s18, 0
      %p148 = por %p146, %p147
      %p149 = scmp.ne.s32.totalorder %s138, %s141
      %p150 = scmp.eq.s32.totalorder %s23, 1
      %p151 = por %p149, %p150
      %p152 = scmp.ne.s32.totalorder %s141, %s142
      %p153 = scmp.eq.s32.totalorder %s23, 0
      %p154 = por %p152, %p153
      %p155 = scmp.ne.s32.totalorder %s141, %s142
      %p156 = scmp.eq.s32.totalorder %s24, 1
      %p157 = por %p155, %p156
      %p159 = scmp.ne.s32.totalorder %s142, %s158
      %p160 = scmp.eq.s32.totalorder %s24, 0
      %p161 = por %p159, %p160
      %p162 = scmp.le.s32.totalorder 1, %s18
      %p163 = scmp.lt.s32.totalorder %s18, 3
      %p164 = pnand %p162, %p163
      %p165 = pneg %p164
      // Predicated region
      $region9: #{tpu_custom_call.1} parent=5 // pred_check
        _
      $region10: #{tpu_custom_call.1} parent=5 // pred_check_branch
        %167 = sbr.rel (%p164) target = $region12
      $region11: #{tpu_custom_call.1} parent=5 // pred_region
        %s168 = ssub.s32 %s18, 1
        // Predicated region
        $region13: #{tpu_custom_call.1} parent=11 // pred_check
          %p169 = pneg %p65
        $region14: #{tpu_custom_call.1} parent=11 // pred_check_branch
          %171 = sbr.rel (%p169) target = $region16
        $region15: #{tpu_custom_call.1} parent=11 // pred_region
          %173 = vsyncadd [#allocation6], 0
          %s174 = sshll.u32 %s1, 4
          %s175 = int_to_ptr.hbm [resolvable:$true] %s174
          %s176 = sshll.u32 [#allocation5], 4
          %s177 = int_to_ptr.vmem [resolvable:$true] %s176
          %182 = dma.hbm_to_vmem [thread:$0]  %s175, 512, %s177, [#allocation6], 128, 128, 8
        $region16: #{tpu_custom_call.1} parent=11 // pred_fallthru
          _
        // Predicated region
        $region17: #{tpu_custom_call.1} parent=11 // pred_check
          %p183 = pneg %p86
        $region18: #{tpu_custom_call.1} parent=11 // pred_check_branch
          %185 = sbr.rel (%p183) target = $region20
        $region19: #{tpu_custom_call.1} parent=11 // pred_region
          _
        $region20: #{tpu_custom_call.1} parent=11 // pred_fallthru
          _
        // Predicated region
        $region21: #{tpu_custom_call.1} parent=11 // pred_check
          %p186 = pneg %p107
        $region22: #{tpu_custom_call.1} parent=11 // pred_check_branch
          %188 = sbr.rel (%p186) target = $region24
        $region23: #{tpu_custom_call.1} parent=11 // pred_region
          %190 = vsyncadd [#allocation6], 0
          %s191 = sshll.u32 %s3, 4
          %s192 = int_to_ptr.hbm [resolvable:$true] %s191
          %s193 = sshll.u32 [#allocation7], 4
          %s194 = int_to_ptr.vmem [resolvable:$true] %s193
          %199 = dma.hbm_to_vmem [thread:$0]  %s192, 512, %s194, [#allocation6], 128, 128, 8
        $region24: #{tpu_custom_call.1} parent=11 // pred_fallthru
          _
        // Predicated region
        $region25: #{tpu_custom_call.1} parent=11 // pred_check
          %p200 = pneg %p128
        $region26: #{tpu_custom_call.1} parent=11 // pred_check_branch
          %202 = sbr.rel (%p200) target = $region28
        $region27: #{tpu_custom_call.1} parent=11 // pred_region
          _
        $region28: #{tpu_custom_call.1} parent=11 // pred_fallthru
          _
      $region12: #{tpu_custom_call.1} parent=5 // pred_fallthru
        _
      %p203 = scmp.lt.s32.totalorder %s18, 2
      // Predicated region
      $region29: #{tpu_custom_call.1} parent=5 // pred_check
        %p204 = pneg %p203
      $region30: #{tpu_custom_call.1} parent=5 // pred_check_branch
        %206 = sbr.rel (%p204) target = $region32
      $region31: #{tpu_custom_call.1} parent=5 // pred_region
        // Predicated region
        $region33: #{tpu_custom_call.1} parent=31 // pred_check
          %p207 = pneg %p38
        $region34: #{tpu_custom_call.1} parent=31 // pred_check_branch
          %209 = sbr.rel (%p207) target = $region36
        $region35: #{tpu_custom_call.1} parent=31 // pred_region
          %s210 = sand.u32 %s28, 1
          %s211 = scalar_lea.sflag [#allocation3], %s210
          %s212 = sand.u32 %s28, 1
          %s213 = smul.addr %s212, 8
          %s214 = scalar_lea.vmem [#allocation2], %s213
          %216 = vsyncadd %s211, 0
          %s217 = smul.addr %s18, 8
          %s218 = scalar_lea.hbm %s0, %s217
          %s220 = sshll.u32 %s218, 4
          %s221 = int_to_ptr.hbm [resolvable:$true] %s220
          %s222 = sshll.u32 %s214, 4
          %s223 = int_to_ptr.vmem [resolvable:$true] %s222
          %225 = dma.hbm_to_vmem [thread:$0]  %s221, 128, %s223, %s211
        $region36: #{tpu_custom_call.1} parent=31 // pred_fallthru
          _
      $region32: #{tpu_custom_call.1} parent=5 // pred_fallthru
        _
      %p226 = scmp.le.s32.totalorder 1, %s18
      %p227 = scmp.lt.s32.totalorder %s18, 3
      %p228 = pnand %p226, %p227
      %p229 = pneg %p228
      // Predicated region
      $region37: #{tpu_custom_call.1} parent=5 // pred_check
        _
      $region38: #{tpu_custom_call.1} parent=5 // pred_check_branch
        %231 = sbr.rel (%p228) target = $region40
      $region39: #{tpu_custom_call.1} parent=5 // pred_region
        %s232 = ssub.s32 %s18, 1
        %s233 = sand.u32 %s31, 1
        %s234 = scalar_lea.sflag [#allocation3], %s233
        %s235 = sand.u32 %s31, 1
        %s236 = smul.addr %s235, 8
        %s237 = scalar_lea.vmem [#allocation2], %s236
        // Predicated region
        $region41: #{tpu_custom_call.1} parent=39 // pred_check
          %p238 = pneg %p44
        $region42: #{tpu_custom_call.1} parent=39 // pred_check_branch
          %240 = sbr.rel (%p238) target = $region44
        $region43: #{tpu_custom_call.1} parent=39 // pred_region
          %242 = dma.done %s234, 128
        $region44: #{tpu_custom_call.1} parent=39 // pred_fallthru
          _
        // Predicated region
        $region45: #{tpu_custom_call.1} parent=39 // pred_check
          %p243 = pneg %p65
        $region46: #{tpu_custom_call.1} parent=39 // pred_check_branch
          %245 = sbr.rel (%p243) target = $region48
        $region47: #{tpu_custom_call.1} parent=39 // pred_region
          %247 = dma.done [#allocation6], 512
        $region48: #{tpu_custom_call.1} parent=39 // pred_fallthru
          _
        // Predicated region
        $region49: #{tpu_custom_call.1} parent=39 // pred_check
          %p248 = pneg %p107
        $region50: #{tpu_custom_call.1} parent=39 // pred_check_branch
          %250 = sbr.rel (%p248) target = $region52
        $region51: #{tpu_custom_call.1} parent=39 // pred_region
          %252 = dma.done [#allocation6], 512
        $region52: #{tpu_custom_call.1} parent=39 // pred_fallthru
          _
        %s253 = sand.u32 %s31, 1
        %s254 = scalar_lea.sflag [#allocation3], %s253
        %s255 = sand.u32 %s31, 1
        %s256 = smul.addr %s255, 8
        %s257 = scalar_lea.vmem [#allocation2], %s256
        %p258 = pneg %p44
        %p259 = pneg %p41
        %p260 = pneg %p65
        %p261 = pneg %p62
        %p262 = pneg %p86
        %p263 = pneg %p83
        %p264 = pneg %p107
        %p265 = pneg %p104
        %p266 = pneg %p128
        %p267 = pneg %p125
        %p268 = pneg %p154
        %p269 = pneg %p151
        %s270 = sand.u32 %s141, 1
        %s271 = scalar_lea.sflag [#allocation4], %s270
        %s272 = sand.u32 %s141, 1
        %s273 = smul.addr %s272, 8
        %s274 = scalar_lea.vmem [#allocation8], %s273
        %v275 = vld [vmem:[%s237] sm:$0xff]
        %v276 = vld [vmem:[#allocation5] sm:$0xff]
        %v277 = vld [vmem:[#allocation5 + $0x8] sm:$0xff]
        %v278 = vld [vmem:[#allocation5 + $0x10] sm:$0xff]
        %v279 = vld [vmem:[#allocation5 + $0x18] sm:$0xf]
        %v280 = vld [vmem:[%s2] sm:$0x1]
        %v282 = vperm.slane %v280, 0
        %vm284 = vcmask 228352
        %v286 = vsel %vm284, %v275, 0
        %vm288 = vcmask 1043456
        %v290 = vsel %vm288, %v279, 0
        %292 = vmatpush.msra.mxu0 0.0
        %293 = vmatpush.msra.mxu0 0.0
        %294 = vmatpush.msra.mxu0 0.0
        %295 = vmatpush.msra.mxu0 0.0
        %296 = vmatpush.msra.mxu0 0.0
        %297 = vmatpush.msra.mxu0 0.0
        %298 = vmatpush.msra.mxu0 0.0
        %299 = vmatpush.msra.mxu0 0.0
        %300 = vmatpush.msra.mxu0 0.0
        %301 = vmatpush.msra.mxu0 0.0
        %302 = vmatpush.msra.mxu0 0.0
        %303 = vmatpush.msra.mxu0 0.0
        %304 = vmatpush.msra.mxu0 %v290
        %305 = vmatpush.msra.mxu0 %v278
        %306 = vmatpush.msra.mxu0 %v277
        %307 = vmatpush.msra.mxu0 %v276
        %308 = vmatmul.f32.gmra.mxu0 %v286
        %v309 = vpop.f32.mrf.mxu0
        %v310 = vadd.f32 %v282, %v309
        %311 = vdwg.mxu0
        %v312 = vtanh.pop %v310
        %v313 = vld [vmem:[#allocation7] sm:$0xff]
        %v314 = vld [vmem:[#allocation7 + $0x8] sm:$0xff]
        %v315 = vld [vmem:[#allocation7 + $0x10] sm:$0xff]
        %v316 = vld [vmem:[#allocation7 + $0x18] sm:$0x3f]
        %v317 = vld [vmem:[%s4] sm:$0x1]
        %v319 = vperm.slane %v317, 0
        %vm321 = vcmask 244736
        %v323 = vsel %vm321, %v312, 0
        %vm325 = vcmask 1045504
        %v327 = vsel %vm325, %v316, 0
        %329 = vmatpush.msra.mxu0 0.0
        %330 = vmatpush.msra.mxu0 0.0
        %331 = vmatpush.msra.mxu0 0.0
        %332 = vmatpush.msra.mxu0 0.0
        %333 = vmatpush.msra.mxu0 0.0
        %334 = vmatpush.msra.mxu0 0.0
        %335 = vmatpush.msra.mxu0 0.0
        %336 = vmatpush.msra.mxu0 0.0
        %337 = vmatpush.msra.mxu0 0.0
        %338 = vmatpush.msra.mxu0 0.0
        %339 = vmatpush.msra.mxu0 0.0
        %340 = vmatpush.msra.mxu0 0.0
        %341 = vmatpush.msra.mxu0 %v327
        %342 = vmatpush.msra.mxu0 %v315
        %343 = vmatpush.msra.mxu0 %v314
        %344 = vmatpush.msra.mxu0 %v313
        %345 = vmatmul.f32.gmra.mxu0 %v323
        %v346 = vpop.f32.mrf.mxu0
        %v347 = vadd.f32 %v319, %v346
        %348 = vdwg.mxu0
        %vm349 = vcmask 285696
        %350 = vst.msk [vmem:[%s274] sm:$0xff] %vm349, %v347
        %s351 = sand.u32 %s141, 1
        %s352 = scalar_lea.sflag [#allocation4], %s351
        %s353 = sand.u32 %s141, 1
        %s354 = smul.addr %s353, 8
        %s355 = scalar_lea.vmem [#allocation8], %s354
        // Predicated region
        $region53: #{tpu_custom_call.1} parent=39 // pred_check
          %p356 = pneg %p151
        $region54: #{tpu_custom_call.1} parent=39 // pred_check_branch
          %358 = sbr.rel (%p356) target = $region56
        $region55: #{tpu_custom_call.1} parent=39 // pred_region
          %360 = vsyncadd %s352, 0
          %s361 = smul.addr %s23, 8
          %s362 = scalar_lea.hbm %s5, %s361
          %s364 = sshll.u32 %s355, 4
          %s365 = int_to_ptr.vmem [resolvable:$true] %s364
          %s366 = sshll.u32 %s362, 4
          %s367 = int_to_ptr.hbm [resolvable:$true] %s366
          %369 = dma.vmem_to_hbm [thread:$0]  %s365, 128, %s367, %s352
        $region56: #{tpu_custom_call.1} parent=39 // pred_fallthru
          _
      $region40: #{tpu_custom_call.1} parent=5 // pred_fallthru
        _
      %p370 = scmp.le.s32.totalorder 2, %s18
      // Predicated region
      $region57: #{tpu_custom_call.1} parent=5 // pred_check
        %p371 = pneg %p370
      $region58: #{tpu_custom_call.1} parent=5 // pred_check_branch
        %373 = sbr.rel (%p371) target = $region60
      $region59: #{tpu_custom_call.1} parent=5 // pred_region
        %s374 = ssub.s32 %s18, 2
        // Predicated region
        $region61: #{tpu_custom_call.1} parent=59 // pred_check
          %p375 = pneg %p157
        $region62: #{tpu_custom_call.1} parent=59 // pred_check_branch
          %377 = sbr.rel (%p375) target = $region64
        $region63: #{tpu_custom_call.1} parent=59 // pred_region
          %s378 = sand.u32 %s142, 1
          %s379 = scalar_lea.sflag [#allocation4], %s378
          %s380 = sand.u32 %s142, 1
          %s381 = smul.addr %s380, 8
          %s382 = scalar_lea.vmem [#allocation8], %s381
          %384 = dma.done %s379, 128
        $region64: #{tpu_custom_call.1} parent=59 // pred_fallthru
          _
      $region60: #{tpu_custom_call.1} parent=5 // pred_fallthru
        _
    $region6: #{tpu_custom_call.1} parent=1 // loop_footer
      %s22 = sadd.s32 1, %s18
    $region7: #{tpu_custom_call.1} parent=1 // loop_footer_branch
      %17 = sbr.rel target = $region3
    $region8: #{tpu_custom_call.1} parent=1 // loop_exit
      _
    %385 = vsyncpa [#allocation3], 1
    %s386 = scalar_lea.sflag [#allocation3], 1
    %387 = vsyncpa %s386, 1
    %388 = vsyncpa [#allocation6], 1
    %389 = vsyncpa [#allocation4], 1
    %s390 = scalar_lea.sflag [#allocation4], 1
    %391 = vsyncpa %s390, 1

</llo_original>
